<compile_context>
chip_gen: v5e
topology: v5e:2x2
jax: 0.10.0
libtpu: 0.0.40
codegen_flags: <defaults>
</compile_context>

<pallas_src>
import jax
import jax.numpy as jnp
from jax.experimental import pallas as pl
from jax.experimental.pallas import tpu as pltpu


_PALLAS_MIN_BATCH = 512  # below this, defer to plain XLA (launch-overhead bound)


# ----------------------------------------------------------------------------
# Kernel
# ----------------------------------------------------------------------------
def qnet_kernel(agg_ref, node_ref, scale_ref, w_ref, sel_ref, bias_ref, out_ref):
    """One batch tile of the (possibly fused) QNet heads.

    agg_ref, node_ref : (tb, L)       lane-packed inputs, L = P*D (P rows / 128 lanes)
    scale_ref         : (2H, L)       row 2h = beta/theta scale for agg, 2h+1 for node
    w_ref             : (2H, L)       Linear weight rows, tiled P times along lanes
    sel_ref           : (H*L, H*P)    0/1 block-diagonal segment-sum selection matrix
    bias_ref          : (1, H*P)      per-head bias interleaved to the packed layout
    out_ref           : (tb, H*P)     out[i, p*H + h] = q(original row i*P + p, head h)
    """
    agg = agg_ref[...]
    node = node_ref[...]
    n_heads = w_ref.shape[0] // 2

    contribs = []
    for h in range(n_heads):                      # H in {1, 2}: static unroll
        s_agg = scale_ref[pl.ds(2 * h, 1), :]     # (1, L), broadcast over sublanes
        s_node = scale_ref[pl.ds(2 * h + 1, 1), :]
        w_agg = w_ref[pl.ds(2 * h, 1), :]
        w_node = w_ref[pl.ds(2 * h + 1, 1), :]
        # relu(scale * x) * w -- exact f32 on the VPU.  Scales may be negative,
        # so they are applied before the ReLU (never folded into the weights).
        agg_act = jnp.maximum(agg * s_agg, 0.0)
        node_act = jnp.maximum(node * s_node, 0.0)
        contribs.append(agg_act * w_agg + node_act * w_node)   # (tb, L)

    contrib = contribs[0] if n_heads == 1 else jnp.concatenate(contribs, axis=-1)
    # Segmented D-lane reduce as ONE tiny MXU matmul against a 0/1 selection
    # matrix: (tb, H*L) @ (H*L, H*P) -> (tb, H*P).  The weight multiply already
    # happened in exact f32 on the VPU; only the 0/1 sum runs on the MXU.
    q = jnp.dot(contrib, sel_ref[...], preferred_element_type=jnp.float32)
    out_ref[...] = (q + bias_ref[...]).astype(out_ref.dtype)


# ----------------------------------------------------------------------------
# Wrapper
# ----------------------------------------------------------------------------
def _choose_packed_tile(bp, lane_width):
    """Pick the batch tile in *packed* rows.

    Target ~4 MiB of input DMA per grid step (>> the ~0.35 us fixed per-step
    pipeline overhead) while keeping double-buffered inputs + the lane-padded
    output + in-kernel temporaries comfortably inside every generation's VMEM
    (v5e 16 MiB default scoped, v7x 64 MiB physical); also keep >= 2 grid steps
    for large batches so the "parallel" axis spans both v7x TensorCores.
    """
    target_bytes = 4 * 1024 * 1024
    per_row = 2 * lane_width * 4          # two f32 operands per packed row
    tb = max(8, (target_bytes // per_row) // 8 * 8)
    if bp > 16:
        half = (((bp + 1) // 2) + 7) // 8 * 8
        tb = min(tb, half)                # guarantees >= 2 grid steps
    tb = min(tb, ((bp + 7) // 8) * 8)     # never bigger than the padded batch
    return max(tb, 8)


def _qnet_heads_pallas(node_embed, agg_embed, scales, weights, biases):
    """Run H heads in one pallas_call.

    node_embed, agg_embed : (B, D) f32
    scales  : (2H,)   [s_agg_0, s_node_0, s_agg_1, s_node_1, ...]
    weights : (H, 2D) torch nn.Linear weight rows (first D cols -> agg part)
    biases  : (H,)
    returns : (B, H) f32
    """
    node_embed = node_embed.astype(jnp.float32)
    agg_embed = agg_embed.astype(jnp.float32)
    scales = scales.astype(jnp.float32)
    weights = weights.astype(jnp.float32)
    biases = biases.astype(jnp.float32)

    B, D = node_embed.shape
    H = weights.shape[0]
    assert weights.shape == (H, 2 * D)

    # Lane packing factor: P consecutive batch rows share one 128-lane row.
    P = 128 // D if (D < 128 and 128 % D == 0) else 1
    L = P * D
    HP = H * P

    bp = -(-B // P)                          # packed rows (ceil)
    tb = _choose_packed_tile(bp, L)
    bp_pad = -(-bp // tb) * tb               # packed rows, padded to tile multiple
    b_pad = bp_pad * P

    def pack(x):
        if b_pad != B:
            x = jnp.pad(x, ((0, b_pad - B), (0, 0)))   # zero rows -> sliced off below
        return x.reshape(bp_pad, L)                      # free row-major reshape

    agg_p = pack(agg_embed)
    node_p = pack(node_embed)

    # Per-head scale rows (broadcast across lanes) and lane-tiled weight rows.
    scale_rows = jnp.broadcast_to(scales[:, None], (2 * H, L))
    w_rows = []
    for h in range(H):
        w_rows.append(jnp.tile(weights[h, :D], P))       # agg half of head h
        w_rows.append(jnp.tile(weights[h, D:], P))       # node half of head h
    w_rows = jnp.stack(w_rows, axis=0)                    # (2H, L)

    # 0/1 selection matrix: sel[h*L + p*D + d, p*H + h] = 1
    rows = jnp.arange(H * L)
    h_idx = rows // L
    p_idx = (rows % L) // D
    cols = p_idx * H + h_idx
    sel = jnp.zeros((H * L, HP), jnp.float32).at[rows, cols].set(1.0)

    bias_il = jnp.tile(biases, P).reshape(1, HP)          # bias_il[p*H + h] = bias[h]

    grid = (bp_pad // tb,)
    out = pl.pallas_call(
        qnet_kernel,
        out_shape=jax.ShapeDtypeStruct((bp_pad, HP), jnp.float32),
        grid_spec=pltpu.PrefetchScalarGridSpec(
            num_scalar_prefetch=0,
            grid=grid,
            in_specs=[
                pl.BlockSpec((tb, L), lambda i: (i, 0)),            # agg (packed)
                pl.BlockSpec((tb, L), lambda i: (i, 0)),            # node (packed)
                pl.BlockSpec((2 * H, L), lambda i: (0, 0)),         # scales (resident)
                pl.BlockSpec((2 * H, L), lambda i: (0, 0)),         # weights (resident)
                pl.BlockSpec((H * L, HP), lambda i: (0, 0)),        # selection (resident)
                pl.BlockSpec((1, HP), lambda i: (0, 0)),            # bias (resident)
            ],
            out_specs=pl.BlockSpec((tb, HP), lambda i: (i, 0)),
        ),
        compiler_params=pltpu.CompilerParams(
            # Batch grid is embarrassingly parallel -> megacore / v7x 2-TC sharding.
            dimension_semantics=("parallel",),
            # Explicit cap: > v5e's 16 MiB default scoped VMEM, well under v7x's
            # 64 MiB physical per TC.
            vmem_limit_bytes=40 * 1024 * 1024,
        ),
    )(agg_p, node_p, scale_rows, w_rows, sel, bias_il)

    # out[i, p*H + h] = q(row i*P + p, head h)  ->  free row-major reshape.
    return out.reshape(b_pad, H)[:B]


# ----------------------------------------------------------------------------
# Module-level API (mirrors the PyTorch forward)
# ----------------------------------------------------------------------------
def qnet_ref(node_embed, agg_embed, params, role="critic"):
    """Pure-JAX reference mirroring the PyTorch forward exactly."""
    if role == "critic":
        s_agg, s_node = params["beta2"], params["beta3"]
        w, b = params["fc1_w"], params["fc1_b"]
    elif role == "actor":
        s_agg, s_node = params["theta2"], params["theta3"]
        w, b = params["fca2_w"], params["fca2_b"]
    else:
        raise ValueError(role)
    combined = jnp.concatenate([s_agg * agg_embed, s_node * node_embed], axis=1)
    return jax.nn.relu(combined) @ w.T + b


def qnet_pallas(node_embed, agg_embed, params, role="critic", *, force_pallas=False):
    """Single-role forward, API-compatible with the torch module."""
    if role == "critic":
        scales = jnp.concatenate([params["beta2"].reshape(1), params["beta3"].reshape(1)])
        w, b = params["fc1_w"], params["fc1_b"]
    elif role == "actor":
        scales = jnp.concatenate([params["theta2"].reshape(1), params["theta3"].reshape(1)])
        w, b = params["fca2_w"], params["fca2_b"]
    else:
        raise ValueError(role)
    B = node_embed.shape[0]
    if not force_pallas and B < _PALLAS_MIN_BATCH:
        # Small-batch fast path: pallas launch/DMA latency would dominate.
        return qnet_ref(node_embed, agg_embed, params, role=role)
    return _qnet_heads_pallas(node_embed, agg_embed, scales, w, b)   # (B, 1)


def qnet_pallas_fused(node_embed, agg_embed, params, *, force_pallas=False):
    """Critic + actor heads fused into one pallas_call (shared input DMA,
    single launch).  Returns (q_critic, logits_actor), each (B, 1)."""
    B = node_embed.shape[0]
    if not force_pallas and B < _PALLAS_MIN_BATCH:
        return (qnet_ref(node_embed, agg_embed, params, "critic"),
                qnet_ref(node_embed, agg_embed, params, "actor"))
    scales = jnp.concatenate([
        params["beta2"].reshape(1), params["beta3"].reshape(1),
        params["theta2"].reshape(1), params["theta3"].reshape(1)])     # (4,)
    weights = jnp.concatenate([params["fc1_w"], params["fca2_w"]], 0)  # (2, 2D)
    biases = jnp.concatenate([params["fc1_b"], params["fca2_b"]], 0)   # (2,)
    out = _qnet_heads_pallas(node_embed, agg_embed, scales, weights, biases)  # (B, 2)
    return out[:, 0:1], out[:, 1:2]


def init_params(key, embed_dim):
    """Deterministic synthetic init matching the PyTorch module's shapes."""
    ks = jax.random.split(key, 10)
    two_d = 2 * embed_dim
    bound = 1.0 / jnp.sqrt(two_d)   # nn.Linear default init bound
    return {
        # beta1 / theta1 exist in the module but are unused in forward.
        "beta1":  jax.random.uniform(ks[0], (two_d, 1), jnp.float32),
        "beta2":  jax.random.uniform(ks[1], (1,), jnp.float32),
        "beta3":  jax.random.uniform(ks[2], (1,), jnp.float32),
        "theta1": jax.random.uniform(ks[3], (two_d, 1), jnp.float32),
        "theta2": jax.random.uniform(ks[4], (1,), jnp.float32),
        "theta3": jax.random.uniform(ks[5], (1,), jnp.float32),
        "fc1_w":  jax.random.uniform(ks[6], (1, two_d), jnp.float32, -bound, bound),
        "fc1_b":  jax.random.uniform(ks[7], (1,), jnp.float32, -bound, bound),
        "fca2_w": jax.random.uniform(ks[8], (1, two_d), jnp.float32, -bound, bound),
        "fca2_b": jax.random.uniform(ks[9], (1,), jnp.float32, -bound, bound),
    }


if __name__ == "__main__":
    key = jax.random.PRNGKey(0)
    k_param, k_node, k_agg, k_node2, k_agg2 = jax.random.split(key, 5)

    embed_dim = 32
    B = 8
    params = init_params(k_param, embed_dim)
    node_embed = jax.random.normal(k_node, (B, embed_dim), jnp.float32)
    agg_embed = jax.random.normal(k_agg, (B, embed_dim), jnp.float32)

    ref_critic = qnet_ref(node_embed, agg_embed, params, "critic")
    ref_actor = qnet_ref(node_embed, agg_embed, params, "actor")

    TOL = dict(atol=2e-3, rtol=1e-3)   # headroom for MXU pass-mode differences

    # ---- Pallas path (forced so the kernel actually runs at this tiny batch) --
    q_critic, q_actor = qnet_pallas_fused(node_embed, agg_embed, params,
                                          force_pallas=True)
    q_critic = jax.block_until_ready(q_critic)
    q_actor = jax.block_until_ready(q_actor)
    assert q_critic.shape == (B, 1) and q_actor.shape == (B, 1)
    assert jnp.allclose(q_critic, ref_critic, **TOL)
    assert jnp.allclose(q_actor, ref_actor, **TOL)

    q_critic_single = jax.block_until_ready(
        qnet_pallas(node_embed, agg_embed, params, "critic", force_pallas=True))
    q_actor_single = jax.block_until_ready(
        qnet_pallas(node_embed, agg_embed, params, "actor", force_pallas=True))
    assert jnp.allclose(q_critic_single, ref_critic, **TOL)
    assert jnp.allclose(q_actor_single, ref_actor, **TOL)

    # ---- Non-multiple batch: exercises zero-padding + a 2-step parallel grid --
    B2 = 100
    node2 = jax.random.normal(k_node2, (B2, embed_dim), jnp.float32)
    agg2 = jax.random.normal(k_agg2, (B2, embed_dim), jnp.float32)
    qc2, qa2 = qnet_pallas_fused(node2, agg2, params, force_pallas=True)
    qc2 = jax.block_until_ready(qc2)
    qa2 = jax.block_until_ready(qa2)
    assert qc2.shape == (B2, 1) and qa2.shape == (B2, 1)
    assert jnp.allclose(qc2, qnet_ref(node2, agg2, params, "critic"), **TOL)
    assert jnp.allclose(qa2, qnet_ref(node2, agg2, params, "actor"), **TOL)

    # ---- Small-batch fast path (defers to fused XLA; no pallas launch) --------
    q_fast = jax.block_until_ready(qnet_pallas(node_embed, agg_embed, params, "critic"))
    assert jnp.allclose(q_fast, ref_critic, atol=1e-5, rtol=1e-5)

    print("KERNEL_OK")
</pallas_src>

<mosaic_0001>
module attributes {stable_mosaic.version = 11 : i64} {
  func.func @qnet_kernel(%arg0: i32, %arg1: memref<8x128xf32, #tpu.memory_space<vmem>>, %arg2: memref<8x128xf32, #tpu.memory_space<vmem>>, %arg3: memref<4x128xf32, #tpu.memory_space<vmem>>, %arg4: memref<4x128xf32, #tpu.memory_space<vmem>>, %arg5: memref<256x8xf32, #tpu.memory_space<vmem>>, %arg6: memref<1x8xf32, #tpu.memory_space<vmem>>, %arg7: memref<8x8xf32, #tpu.memory_space<vmem>>) attributes {dimension_semantics = [#tpu.dimension_semantics<parallel>], iteration_bounds = array<i64: 1>, scalar_prefetch = 0 : i64, scratch_operands = 0 : i64, tpu.core_type = #tpu.core_type<tc>, window_params = [{transform_indices = @transform_0, window_bounds = array<i64: 8, 128>}, {transform_indices = @transform_1, window_bounds = array<i64: 8, 128>}, {pipeline_mode = #tpu.pipeline_mode<synchronous>, transform_indices = @transform_2, window_bounds = array<i64: 4, 128>}, {pipeline_mode = #tpu.pipeline_mode<synchronous>, transform_indices = @transform_3, window_bounds = array<i64: 4, 128>}, {pipeline_mode = #tpu.pipeline_mode<synchronous>, transform_indices = @transform_4, window_bounds = array<i64: 256, 8>}, {pipeline_mode = #tpu.pipeline_mode<synchronous>, transform_indices = @transform_5, window_bounds = array<i64: 1, 8>}, {transform_indices = @transform_6, window_bounds = array<i64: 8, 8>}]} {
    %c0 = arith.constant 0 : index
    %c0_0 = arith.constant 0 : index
    %0 = vector.load %arg1[%c0, %c0_0] : memref<8x128xf32, #tpu.memory_space<vmem>>, vector<8x128xf32>
    %c0_1 = arith.constant 0 : index
    %c0_2 = arith.constant 0 : index
    %1 = vector.load %arg2[%c0_1, %c0_2] : memref<8x128xf32, #tpu.memory_space<vmem>>, vector<8x128xf32>
    %c0_3 = arith.constant 0 : index
    %c0_4 = arith.constant 0 : index
    %2 = vector.load %arg3[%c0_3, %c0_4] : memref<4x128xf32, #tpu.memory_space<vmem>>, vector<1x128xf32>
    %c1 = arith.constant 1 : index
    %c0_5 = arith.constant 0 : index
    %3 = vector.load %arg3[%c1, %c0_5] : memref<4x128xf32, #tpu.memory_space<vmem>>, vector<1x128xf32>
    %c0_6 = arith.constant 0 : index
    %c0_7 = arith.constant 0 : index
    %4 = vector.load %arg4[%c0_6, %c0_7] : memref<4x128xf32, #tpu.memory_space<vmem>>, vector<1x128xf32>
    %c1_8 = arith.constant 1 : index
    %c0_9 = arith.constant 0 : index
    %5 = vector.load %arg4[%c1_8, %c0_9] : memref<4x128xf32, #tpu.memory_space<vmem>>, vector<1x128xf32>
    %6 = vector.broadcast %2 : vector<1x128xf32> to vector<8x128xf32>
    %7 = arith.mulf %0, %6 : vector<8x128xf32>
    %cst = arith.constant 0.000000e+00 : f32
    %8 = vector.broadcast %cst : f32 to vector<8x128xf32>
    %9 = arith.maximumf %7, %8 : vector<8x128xf32>
    %10 = vector.broadcast %3 : vector<1x128xf32> to vector<8x128xf32>
    %11 = arith.mulf %1, %10 : vector<8x128xf32>
    %cst_10 = arith.constant 0.000000e+00 : f32
    %12 = vector.broadcast %cst_10 : f32 to vector<8x128xf32>
    %13 = arith.maximumf %11, %12 : vector<8x128xf32>
    %14 = vector.broadcast %4 : vector<1x128xf32> to vector<8x128xf32>
    %15 = arith.mulf %9, %14 : vector<8x128xf32>
    %16 = vector.broadcast %5 : vector<1x128xf32> to vector<8x128xf32>
    %17 = arith.mulf %13, %16 : vector<8x128xf32>
    %18 = arith.addf %15, %17 : vector<8x128xf32>
    %c2 = arith.constant 2 : index
    %c0_11 = arith.constant 0 : index
    %19 = vector.load %arg3[%c2, %c0_11] : memref<4x128xf32, #tpu.memory_space<vmem>>, vector<1x128xf32>
    %c3 = arith.constant 3 : index
    %c0_12 = arith.constant 0 : index
    %20 = vector.load %arg3[%c3, %c0_12] : memref<4x128xf32, #tpu.memory_space<vmem>>, vector<1x128xf32>
    %c2_13 = arith.constant 2 : index
    %c0_14 = arith.constant 0 : index
    %21 = vector.load %arg4[%c2_13, %c0_14] : memref<4x128xf32, #tpu.memory_space<vmem>>, vector<1x128xf32>
    %c3_15 = arith.constant 3 : index
    %c0_16 = arith.constant 0 : index
    %22 = vector.load %arg4[%c3_15, %c0_16] : memref<4x128xf32, #tpu.memory_space<vmem>>, vector<1x128xf32>
    %23 = vector.broadcast %19 : vector<1x128xf32> to vector<8x128xf32>
    %24 = arith.mulf %0, %23 : vector<8x128xf32>
    %cst_17 = arith.constant 0.000000e+00 : f32
    %25 = vector.broadcast %cst_17 : f32 to vector<8x128xf32>
    %26 = arith.maximumf %24, %25 : vector<8x128xf32>
    %27 = vector.broadcast %20 : vector<1x128xf32> to vector<8x128xf32>
    %28 = arith.mulf %1, %27 : vector<8x128xf32>
    %cst_18 = arith.constant 0.000000e+00 : f32
    %29 = vector.broadcast %cst_18 : f32 to vector<8x128xf32>
    %30 = arith.maximumf %28, %29 : vector<8x128xf32>
    %31 = vector.broadcast %21 : vector<1x128xf32> to vector<8x128xf32>
    %32 = arith.mulf %26, %31 : vector<8x128xf32>
    %33 = vector.broadcast %22 : vector<1x128xf32> to vector<8x128xf32>
    %34 = arith.mulf %30, %33 : vector<8x128xf32>
    %35 = arith.addf %32, %34 : vector<8x128xf32>
    %36 = tpu.concatenate %18, %35 in 1 : vector<8x128xf32>, vector<8x128xf32> -> vector<8x256xf32>
    %c0_19 = arith.constant 0 : index
    %c0_20 = arith.constant 0 : index
    %37 = vector.load %arg5[%c0_19, %c0_20] : memref<256x8xf32, #tpu.memory_space<vmem>>, vector<256x8xf32>
    %cst_21 = arith.constant dense<0.000000e+00> : vector<8x8xf32>
    %38 = tpu.matmul %36, %37, %cst_21 {dimension_numbers = #tpu.dot_dimension_numbers<[1], [0], [0], [1], [0, 0, 1, 1], [], []>} : vector<8x256xf32>, vector<256x8xf32>, vector<8x8xf32> -> vector<8x8xf32>
    %c0_22 = arith.constant 0 : index
    %c0_23 = arith.constant 0 : index
    %39 = vector.load %arg6[%c0_22, %c0_23] : memref<1x8xf32, #tpu.memory_space<vmem>>, vector<1x8xf32>
    %40 = vector.broadcast %39 : vector<1x8xf32> to vector<8x8xf32>
    %41 = arith.addf %38, %40 : vector<8x8xf32>
    %c0_24 = arith.constant 0 : index
    %c0_25 = arith.constant 0 : index
    %42 = vector.load %arg7[%c0_24, %c0_25] : memref<8x8xf32, #tpu.memory_space<vmem>>, vector<8x8xf32>
    tpu.vector_store %arg7[%c0_24, %c0_25], %41 {strides = array<i32>} : memref<8x8xf32, #tpu.memory_space<vmem>>, vector<8x8xf32>,
    return
  }
  func.func @transform_0(%arg0: i32) -> (i32, i32) {
    %c0_i32 = arith.constant 0 : i32
    %c0_i32_0 = arith.constant 0 : i32
    return %arg0, %c0_i32 : i32, i32
  }
  func.func @transform_1(%arg0: i32) -> (i32, i32) {
    %c0_i32 = arith.constant 0 : i32
    %c0_i32_0 = arith.constant 0 : i32
    return %arg0, %c0_i32 : i32, i32
  }
  func.func @transform_2(%arg0: i32) -> (i32, i32) {
    %c0_i32 = arith.constant 0 : i32
    %c0_i32_0 = arith.constant 0 : i32
    %c0_i32_1 = arith.constant 0 : i32
    return %c0_i32, %c0_i32_0 : i32, i32
  }
  func.func @transform_3(%arg0: i32) -> (i32, i32) {
    %c0_i32 = arith.constant 0 : i32
    %c0_i32_0 = arith.constant 0 : i32
    %c0_i32_1 = arith.constant 0 : i32
    return %c0_i32, %c0_i32_0 : i32, i32
  }
  func.func @transform_4(%arg0: i32) -> (i32, i32) {
    %c0_i32 = arith.constant 0 : i32
    %c0_i32_0 = arith.constant 0 : i32
    %c0_i32_1 = arith.constant 0 : i32
    return %c0_i32, %c0_i32_0 : i32, i32
  }
  func.func @transform_5(%arg0: i32) -> (i32, i32) {
    %c0_i32 = arith.constant 0 : i32
    %c0_i32_0 = arith.constant 0 : i32
    %c0_i32_1 = arith.constant 0 : i32
    return %c0_i32, %c0_i32_0 : i32, i32
  }
  func.func @transform_6(%arg0: i32) -> (i32, i32) {
    %c0_i32 = arith.constant 0 : i32
    %c0_i32_0 = arith.constant 0 : i32
    return %arg0, %c0_i32 : i32, i32
  }
}

</mosaic_0001>

<llo_original>
// kernel: tpu_custom_call.1
$region0: #{tpu_custom_call.1}
  #allocation0 [shape = 'u32[]', space=smem, size = 0x4, offset = 0x4, fixed_abs, tag = 'smem constant byte address 0x4 - core index']
  #allocation1 [shape = 'u32[72,128]{1,0:T(1,128)}', space=vmem, size = 0x9000, scoped, tag = 'internal scratch']
  %s0 = inlined_call_operand.vmem [shape: f32[8,128], index: 0, kind: input, shape index: {}]
  %s1 = inlined_call_operand.vmem [shape: f32[8,128], index: 1, kind: input, shape index: {}]
  %s2 = inlined_call_operand.vmem [shape: f32[4,128], index: 2, kind: input, shape index: {}]
  %s3 = inlined_call_operand.vmem [shape: f32[4,128], index: 3, kind: input, shape index: {}]
  %s4 = inlined_call_operand.vmem [shape: f32[256,8], index: 4, kind: input, shape index: {}]
  %s5 = inlined_call_operand.vmem [shape: f32[1,8], index: 5, kind: input, shape index: {}]
  %s6 = inlined_call_operand.hbm [shape: f32[8,8], index: 6, kind: output, shape index: {}]
  %s7 = sld [smem:[#allocation0]]
  $region34: #{tpu_custom_call.1} parent=0
    _
  %s9 = ssub.s32 1, %s7
  %s10 = scalar_select 0, %s9, %s7
  $region1: #{tpu_custom_call.1} parent=0
    #allocation2 [shape = 'u8[4096]{0}', space=vmem, size = 0x1000, scoped, tag = 'output window, operand 0, single buffered']
    #allocation3 [shape = 's32[1]{0}', space=sflag, size = 0x4, scoped, tag = 'scoped memory for tpu_custom_call.1']
    %11 = vsyncpa [#allocation3], 0
    // Predicated region
    $region2: #{tpu_custom_call.1} parent=1 // pred_check
      _
    $region3: #{tpu_custom_call.1} parent=1 // pred_check_branch
      %13 = sbr.rel (0) target = $region5
    $region4: #{tpu_custom_call.1} parent=1 // pred_region
      _
    $region5: #{tpu_custom_call.1} parent=1 // pred_fallthru
      _
    // Predicated region
    $region6: #{tpu_custom_call.1} parent=1 // pred_check
      _
    $region7: #{tpu_custom_call.1} parent=1 // pred_check_branch
      %15 = sbr.rel (0) target = $region9
    $region8: #{tpu_custom_call.1} parent=1 // pred_region
      _
    $region9: #{tpu_custom_call.1} parent=1 // pred_fallthru
      _
    // Predicated region
    $region10: #{tpu_custom_call.1} parent=1 // pred_check
      _
    $region11: #{tpu_custom_call.1} parent=1 // pred_check_branch
      %17 = sbr.rel (0) target = $region13
    $region12: #{tpu_custom_call.1} parent=1 // pred_region
      _
    $region13: #{tpu_custom_call.1} parent=1 // pred_fallthru
      _
    // Predicated region
    $region14: #{tpu_custom_call.1} parent=1 // pred_check
      _
    $region15: #{tpu_custom_call.1} parent=1 // pred_check_branch
      %19 = sbr.rel (0) target = $region17
    $region16: #{tpu_custom_call.1} parent=1 // pred_region
      _
    $region17: #{tpu_custom_call.1} parent=1 // pred_fallthru
      _
    // Predicated region
    $region18: #{tpu_custom_call.1} parent=1 // pred_check
      _
    $region19: #{tpu_custom_call.1} parent=1 // pred_check_branch
      %21 = sbr.rel (0) target = $region21
    $region20: #{tpu_custom_call.1} parent=1 // pred_region
      _
    $region21: #{tpu_custom_call.1} parent=1 // pred_fallthru
      _
    // Predicated region
    $region22: #{tpu_custom_call.1} parent=1 // pred_check
      _
    $region23: #{tpu_custom_call.1} parent=1 // pred_check_branch
      %23 = sbr.rel (0) target = $region25
    $region24: #{tpu_custom_call.1} parent=1 // pred_region
      _
    $region25: #{tpu_custom_call.1} parent=1 // pred_fallthru
      _
    %v24 = vld [vmem:[%s0] sm:$0xff]
    %v25 = vld [vmem:[%s1] sm:$0xff]
    %v26 = vld [vmem:[%s2] sm:$0x1]
    %v27 = vld [vmem:[%s2 + $0x1] sm:$0x1]
    %v28 = vld [vmem:[%s3] sm:$0x1]
    %v29 = vld [vmem:[%s3 + $0x1] sm:$0x1]
    %v30 = vperm.slane %v26, 0
    %v31 = vmul.f32 %v24, %v30
    %v32 = vmax.f32 %v31, 0.0
    %v33 = vperm.slane %v27, 0
    %v34 = vmul.f32 %v25, %v33
    %v35 = vmax.f32 %v34, 0.0
    %v36 = vperm.slane %v28, 0
    %v37 = vmul.f32 %v32, %v36
    %v38 = vperm.slane %v29, 0
    %v39 = vmul.f32 %v35, %v38
    %v40 = vadd.f32 %v37, %v39
    %v41 = vld [vmem:[%s2 + $0x2] sm:$0x1]
    %v42 = vld [vmem:[%s2 + $0x3] sm:$0x1]
    %v43 = vld [vmem:[%s3 + $0x2] sm:$0x1]
    %v44 = vld [vmem:[%s3 + $0x3] sm:$0x1]
    %v45 = vperm.slane %v41, 0
    %v46 = vmul.f32 %v24, %v45
    %v47 = vmax.f32 %v46, 0.0
    %v48 = vperm.slane %v42, 0
    %v49 = vmul.f32 %v25, %v48
    %v50 = vmax.f32 %v49, 0.0
    %v51 = vperm.slane %v43, 0
    %v52 = vmul.f32 %v47, %v51
    %v53 = vperm.slane %v44, 0
    %v54 = vmul.f32 %v50, %v53
    %v55 = vadd.f32 %v52, %v54
    %v56 = vld [vmem:[%s4] sm:$0xff]
    %v57 = vld [vmem:[%s4 + $0x8] sm:$0xff]
    %v58 = vld [vmem:[%s4 + $0x10] sm:$0xff]
    %v59 = vld [vmem:[%s4 + $0x18] sm:$0xff]
    %v60 = vld [vmem:[%s4 + $0x20] sm:$0xff]
    %v61 = vld [vmem:[%s4 + $0x28] sm:$0xff]
    %v62 = vld [vmem:[%s4 + $0x30] sm:$0xff]
    %v63 = vld [vmem:[%s4 + $0x38] sm:$0xff]
    %v64 = vld [vmem:[%s4 + $0x40] sm:$0xff]
    %v65 = vld [vmem:[%s4 + $0x48] sm:$0xff]
    %v66 = vld [vmem:[%s4 + $0x50] sm:$0xff]
    %v67 = vld [vmem:[%s4 + $0x58] sm:$0xff]
    %v68 = vld [vmem:[%s4 + $0x60] sm:$0xff]
    %v69 = vld [vmem:[%s4 + $0x68] sm:$0xff]
    %v70 = vld [vmem:[%s4 + $0x70] sm:$0xff]
    %v71 = vld [vmem:[%s4 + $0x78] sm:$0xff]
    %v72 = vld [vmem:[%s4 + $0x80] sm:$0xff]
    %v73 = vld [vmem:[%s4 + $0x88] sm:$0xff]
    %v74 = vld [vmem:[%s4 + $0x90] sm:$0xff]
    %v75 = vld [vmem:[%s4 + $0x98] sm:$0xff]
    %v76 = vld [vmem:[%s4 + $0xa0] sm:$0xff]
    %v77 = vld [vmem:[%s4 + $0xa8] sm:$0xff]
    %v78 = vld [vmem:[%s4 + $0xb0] sm:$0xff]
    %v79 = vld [vmem:[%s4 + $0xb8] sm:$0xff]
    %v80 = vld [vmem:[%s4 + $0xc0] sm:$0xff]
    %v81 = vld [vmem:[%s4 + $0xc8] sm:$0xff]
    %v82 = vld [vmem:[%s4 + $0xd0] sm:$0xff]
    %v83 = vld [vmem:[%s4 + $0xd8] sm:$0xff]
    %v84 = vld [vmem:[%s4 + $0xe0] sm:$0xff]
    %v85 = vld [vmem:[%s4 + $0xe8] sm:$0xff]
    %v86 = vld [vmem:[%s4 + $0xf0] sm:$0xff]
    %v87 = vld [vmem:[%s4 + $0xf8] sm:$0xff]
    %v88 = vld [vmem:[%s5] sm:$0x1]
    %v90 = vperm.slane %v88, 0
    %92 = vmatpush.msra.mxu0 %v71
    %93 = vmatpush.msra.mxu0 %v70
    %94 = vmatpush.msra.mxu0 %v69
    %95 = vmatpush.msra.mxu0 %v68
    %96 = vmatpush.msra.mxu0 %v67
    %97 = vmatpush.msra.mxu0 %v66
    %98 = vmatpush.msra.mxu0 %v65
    %99 = vmatpush.msra.mxu0 %v64
    %100 = vmatpush.msra.mxu0 %v63
    %101 = vmatpush.msra.mxu0 %v62
    %102 = vmatpush.msra.mxu0 %v61
    %103 = vmatpush.msra.mxu0 %v60
    %104 = vmatpush.msra.mxu0 %v59
    %105 = vmatpush.msra.mxu0 %v58
    %106 = vmatpush.msra.mxu0 %v57
    %107 = vmatpush.msra.mxu0 %v56
    %108 = vmatmul.f32.gmra.mxu0 %v40
    %v109 = vpop.f32.mrf.mxu0
    %v110 = vadd.f32 %v90, %v109
    %111 = vdwg.mxu0
    %112 = vmatpush.msra.mxu0 %v87
    %113 = vmatpush.msra.mxu0 %v86
    %114 = vmatpush.msra.mxu0 %v85
    %115 = vmatpush.msra.mxu0 %v84
    %116 = vmatpush.msra.mxu0 %v83
    %117 = vmatpush.msra.mxu0 %v82
    %118 = vmatpush.msra.mxu0 %v81
    %119 = vmatpush.msra.mxu0 %v80
    %120 = vmatpush.msra.mxu0 %v79
    %121 = vmatpush.msra.mxu0 %v78
    %122 = vmatpush.msra.mxu0 %v77
    %123 = vmatpush.msra.mxu0 %v76
    %124 = vmatpush.msra.mxu0 %v75
    %125 = vmatpush.msra.mxu0 %v74
    %126 = vmatpush.msra.mxu0 %v73
    %127 = vmatpush.msra.mxu0 %v72
    %128 = vmatmul.f32.gmra.mxu0 %v55
    %v129 = vpop.f32.mrf.mxu0
    %v130 = vadd.f32 %v110, %v129
    %131 = vdwg.mxu0
    %vm132 = vcmask 64512
    %133 = vst.msk [vmem:[#allocation2] sm:$0xff] %vm132, %v130
    // Predicated region
    $region26: #{tpu_custom_call.1} parent=1 // pred_check
      _
    $region27: #{tpu_custom_call.1} parent=1 // pred_check_branch
      %135 = sbr.rel (0) target = $region29
    $region28: #{tpu_custom_call.1} parent=1 // pred_region
      %137 = vsyncadd [#allocation3], 0
      %s139 = sshll.u32 [#allocation2], 4
      %s140 = int_to_ptr.vmem [resolvable:$true] %s139
      %s141 = sshll.u32 %s6, 4
      %s142 = int_to_ptr.hbm [resolvable:$true] %s141
      %144 = dma.vmem_to_hbm [thread:$0]  %s140, 128, %s142, [#allocation3]
    $region29: #{tpu_custom_call.1} parent=1 // pred_fallthru
      _
    // Predicated region
    $region30: #{tpu_custom_call.1} parent=1 // pred_check
      _
    $region31: #{tpu_custom_call.1} parent=1 // pred_check_branch
      %146 = sbr.rel (0) target = $region33
    $region32: #{tpu_custom_call.1} parent=1 // pred_region
      %148 = dma.done [#allocation3], 128
    $region33: #{tpu_custom_call.1} parent=1 // pred_fallthru
      _
    %149 = vsyncpa [#allocation3], 1

</llo_original>
